<compile_context>
chip_gen: v6e
topology: v6e:2x2x1
jax: 0.10.0
libtpu: 0.0.40
codegen_flags: <defaults>
</compile_context>

<pallas_src>
import functools
import math

import jax
import jax.numpy as jnp
from jax import lax
from jax.experimental import pallas as pl
from jax.experimental.pallas import tpu as pltpu

_MiB = 1024 * 1024


def _round_up(x, m):
    return (x + m - 1) // m * m


def _pick_tile(dim, cap, multiple):
    """Largest tile <= cap that divides `dim` and is a multiple of `multiple`.

    `dim` must already be a multiple of `multiple` (the wrappers pad to
    guarantee this); fail loudly rather than falling back to the full
    dimension, which blows VMEM at real BERT vocab sizes."""
    if dim % multiple != 0:
        raise ValueError(
            f"dim={dim} is not a multiple of {multiple}; pad it first "
            f"(prepare_params pads the vocab, the wrapper pads rows).")
    if dim <= cap:
        return dim
    t = (cap // multiple) * multiple
    while t > multiple:
        if dim % t == 0:
            return t
        t -= multiple
    return multiple  # always divides, since dim % multiple == 0


def _mlm_tuning_for_device():
    """Generation-specific tile caps / scoped-VMEM limit.

    v5e / v6e: 128 MiB physical VMEM, HBM-bandwidth bound on decoder-weight
      re-streams -> big row tile (tm=1024) and a 96 MiB scoped limit.
    v7x (and anything unrecognized): 64 MiB physical VMEM per TensorCore ->
      keep the scoped limit <= ~56 MiB and a 512-row tile.
    """
    try:
        kind = jax.devices()[0].device_kind.lower()
    except Exception:  # no devices visible at trace time
        kind = ""
    if "v5" in kind or "v6" in kind:
        return dict(tm_cap=1024, tn_cap=2048, vmem_limit_bytes=96 * _MiB)
    return dict(tm_cap=512, tn_cap=2048, vmem_limit_bytes=56 * _MiB)


# ---------------------------------------------------------------------------
# Kernel: MLM prediction head
#   y = LayerNorm(gelu(x @ Wd + bd)) @ Wdec + dec_bias
# Grid = (row tiles, vocab tiles).  The transform result h depends only on
# the row tile, so it is computed at vocab tile j == 0 and reused from a VMEM
# stash for the remaining vocab tiles of that row tile.
# ---------------------------------------------------------------------------
def _mlm_head_kernel(x_ref, wd_ref, bd_ref, gamma_ref, beta_ref,
                     wdec_ref, bdec_ref, out_ref, h_ref, *, eps):
    @pl.when(pl.program_id(1) == 0)
    def _():
        x = x_ref[...].astype(wd_ref.dtype)
        h = jnp.dot(x, wd_ref[...], preferred_element_type=jnp.float32)
        h = h + bd_ref[...].astype(jnp.float32)
        # exact (erf-based) GELU -- matches torch.nn.GELU() default
        h = 0.5 * h * (1.0 + lax.erf(h * (1.0 / math.sqrt(2.0))))
        # LayerNorm over hidden dim (f32 statistics)
        mu = jnp.mean(h, axis=-1, keepdims=True)
        var = jnp.mean(jnp.square(h - mu), axis=-1, keepdims=True)
        h = (h - mu) * lax.rsqrt(var + eps)
        h = (h * gamma_ref[...].astype(jnp.float32)
             + beta_ref[...].astype(jnp.float32))
        # Stash in the compute dtype (bf16) so the decoder matmul below needs
        # no per-vocab-step recast and the scratch footprint is halved.
        h_ref[...] = h.astype(h_ref.dtype)

    # decoder tile: (tm, H) @ (H, tn) on the MXU, f32 accumulation
    y = jnp.dot(h_ref[...], wdec_ref[...], preferred_element_type=jnp.float32)
    out_ref[...] = (y + bdec_ref[...].astype(jnp.float32)).astype(out_ref.dtype)


def mlm_prediction_head(seq_out_2d, w_dense_t, b_dense, gamma, beta,
                        w_dec_t, dec_bias, *, eps, out_dtype=jnp.float32,
                        tm_cap=None, tn_cap=None, vmem_limit_bytes=None):
    tuning = _mlm_tuning_for_device()
    tm_cap = tuning["tm_cap"] if tm_cap is None else tm_cap
    tn_cap = tuning["tn_cap"] if tn_cap is None else tn_cap
    vmem_limit_bytes = (tuning["vmem_limit_bytes"]
                        if vmem_limit_bytes is None else vmem_limit_bytes)

    M, H = seq_out_2d.shape
    Vp = w_dec_t.shape[1]
    if Vp % 128 != 0:
        raise ValueError("decoder weight must be lane-padded (vocab % 128 == 0); "
                         "run it through prepare_params().")

    compute_dtype = w_dec_t.dtype
    # Pre-cast activations: halves the activation read and feeds the MXU its
    # native bf16 operands (f32 accumulation stays inside the kernel).
    x = seq_out_2d.astype(compute_dtype)

    # Row tile as large as the VMEM budget allows -> fewer full passes over
    # the (H, V) decoder weight.  Pad rows so the grid never drops remainder.
    tm = min(tm_cap, _round_up(M, 8))
    Mp = _round_up(M, tm)
    if Mp != M:
        x = jnp.pad(x, ((0, Mp - M), (0, 0)))
    tn = _pick_tile(Vp, tn_cap, 128)

    kernel = functools.partial(_mlm_head_kernel, eps=eps)
    out = pl.pallas_call(
        kernel,
        out_shape=jax.ShapeDtypeStruct((Mp, Vp), out_dtype),
        grid_spec=pltpu.PrefetchScalarGridSpec(
            num_scalar_prefetch=0,
            grid=(Mp // tm, Vp // tn),
            in_specs=[
                pl.BlockSpec((tm, H), lambda i, j: (i, 0)),   # activations
                pl.BlockSpec((H, H), lambda i, j: (0, 0)),    # dense W (pre-T)
                pl.BlockSpec((1, H), lambda i, j: (0, 0)),    # dense bias
                pl.BlockSpec((1, H), lambda i, j: (0, 0)),    # LN gamma
                pl.BlockSpec((1, H), lambda i, j: (0, 0)),    # LN beta
                pl.BlockSpec((H, tn), lambda i, j: (0, j)),   # decoder W tile
                pl.BlockSpec((1, tn), lambda i, j: (0, j)),   # decoder bias
            ],
            out_specs=pl.BlockSpec((tm, tn), lambda i, j: (i, j)),
            scratch_shapes=[pltpu.VMEM((tm, H), compute_dtype)],   # h stash
        ),
        compiler_params=pltpu.CompilerParams(
            # Row axis "parallel" (v7x shards it over its 2 TCs; keep M//tm
            # even at real sizes).  Vocab axis MUST stay "arbitrary": the
            # h-stash carry needs j==0 to run on the same core as j>0.
            dimension_semantics=("parallel", "arbitrary"),
            vmem_limit_bytes=vmem_limit_bytes),
    )(x, w_dense_t, b_dense, gamma, beta, w_dec_t, dec_bias)
    return out[:M]


# ---------------------------------------------------------------------------
# One-time parameter preparation (transpose / cast / pad at LOAD time, never
# per forward call).  Weights arrive in PyTorch [out, in] convention.
# ---------------------------------------------------------------------------
def prepare_params(raw, *, compute_dtype=jnp.bfloat16, vocab_pad_multiple=128):
    H = raw["dense_w"].shape[0]
    V = raw["decoder_w"].shape[0]
    Vp = _round_up(V, vocab_pad_multiple)

    w_dec_t = jnp.zeros((H, Vp), compute_dtype)
    w_dec_t = w_dec_t.at[:, :V].set(raw["decoder_w"].T.astype(compute_dtype))
    dec_bias = jnp.zeros((1, Vp), jnp.float32)
    dec_bias = dec_bias.at[:, :V].set(
        raw["decoder_bias"].reshape(1, -1).astype(jnp.float32))

    return {
        "dense_w_t":    raw["dense_w"].T.astype(compute_dtype),   # (H, H)
        "dense_b":      raw["dense_b"].reshape(1, H).astype(jnp.float32),
        "ln_gamma":     raw["ln_gamma"].reshape(1, H).astype(jnp.float32),
        "ln_beta":      raw["ln_beta"].reshape(1, H).astype(jnp.float32),
        "decoder_w_t":  w_dec_t,                                  # (H, Vp)
        "decoder_bias": dec_bias,                                 # (1, Vp)
        "nsp_w_t":      raw["nsp_w"].T.astype(jnp.float32),       # (H, 2)
        "nsp_b":        raw["nsp_b"].reshape(1, -1).astype(jnp.float32),
        "vocab_size":   V,
    }


# ---------------------------------------------------------------------------
# BertPreTrainingHeads.forward equivalent
# ---------------------------------------------------------------------------
def bert_pretraining_heads(sequence_output, pooled_output, prepped, *, eps,
                           scores_dtype=jnp.float32):
    B, S, H = sequence_output.shape
    seq_2d = sequence_output.reshape(B * S, H)
    V = prepped["vocab_size"]

    pred = mlm_prediction_head(
        seq_2d,
        prepped["dense_w_t"], prepped["dense_b"],
        prepped["ln_gamma"], prepped["ln_beta"],
        prepped["decoder_w_t"], prepped["decoder_bias"],
        eps=eps, out_dtype=scores_dtype)
    prediction_scores = pred[:, :V].reshape(B, S, V)

    # NSP head: a (B, H) x (H, 2) matmul is microseconds of work; a separate
    # pallas_call would only add launch + padding overhead, so XLA fuses it.
    seq_relationship_score = (
        jnp.dot(pooled_output.astype(jnp.float32), prepped["nsp_w_t"],
                preferred_element_type=jnp.float32) + prepped["nsp_b"])

    # TODO(synk): PyTorch `breakpoint()` calls in forward have no kernel
    # equivalent and are intentionally omitted.
    return prediction_scores, seq_relationship_score


# ---------------------------------------------------------------------------
# Pure-JAX f32 reference for correctness check
# ---------------------------------------------------------------------------
def reference(sequence_output, pooled_output, params, *, eps):
    h = sequence_output @ params["dense_w"].T + params["dense_b"]
    h = jax.nn.gelu(h, approximate=False)
    mu = jnp.mean(h, axis=-1, keepdims=True)
    var = jnp.mean(jnp.square(h - mu), axis=-1, keepdims=True)
    h = (h - mu) / jnp.sqrt(var + eps) * params["ln_gamma"] + params["ln_beta"]
    pred = h @ params["decoder_w"].T + params["decoder_bias"]
    nsp = pooled_output @ params["nsp_w"].T + params["nsp_b"]
    return pred, nsp


if __name__ == "__main__":
    # small config: batch=2, seq=8, hidden=32, vocab=128
    B, S, H, V = 2, 8, 32, 128
    EPS = 1e-12

    key = jax.random.PRNGKey(0)
    keys = jax.random.split(key, 8)

    sequence_output = jax.random.normal(keys[0], (B, S, H), jnp.float32)
    pooled_output = jax.random.normal(keys[1], (B, H), jnp.float32)

    params = {
        "dense_w":      jax.random.normal(keys[2], (H, H), jnp.float32) * 0.05,
        "dense_b":      jax.random.normal(keys[3], (H,), jnp.float32) * 0.02,
        "ln_gamma":     jnp.ones((H,), jnp.float32),
        "ln_beta":      jnp.zeros((H,), jnp.float32),
        "decoder_w":    jax.random.normal(keys[4], (V, H), jnp.float32) * 0.05,
        "decoder_bias": jnp.zeros((V,), jnp.float32),   # nn.Parameter(torch.zeros)
        "nsp_w":        jax.random.normal(keys[5], (2, H), jnp.float32) * 0.05,
        "nsp_b":        jax.random.normal(keys[6], (2,), jnp.float32) * 0.02,
    }

    # one-time parameter prep: transposes, bf16 casts, vocab lane padding
    prepped = prepare_params(params, compute_dtype=jnp.bfloat16)

    pred, nsp = bert_pretraining_heads(sequence_output, pooled_output,
                                       prepped, eps=EPS)
    jax.block_until_ready((pred, nsp))

    pred_ref, nsp_ref = reference(sequence_output, pooled_output,
                                  params, eps=EPS)

    assert pred.shape == (B, S, V) and nsp.shape == (B, 2)
    assert pred.dtype == jnp.float32
    # bf16 matmul inputs (f32 accumulation) vs pure-f32 reference
    assert jnp.allclose(pred, pred_ref, atol=3e-2, rtol=3e-2)
    assert jnp.allclose(nsp, nsp_ref, atol=1e-4, rtol=1e-4)

    print("KERNEL_OK")
</pallas_src>

<mosaic_0001>
module attributes {stable_mosaic.version = 11 : i64} {
  func.func @_mlm_head_kernel(%arg0: i32, %arg1: i32, %arg2: memref<16x32xbf16, #tpu.memory_space<vmem>>, %arg3: memref<32x32xbf16, #tpu.memory_space<vmem>>, %arg4: memref<1x32xf32, #tpu.memory_space<vmem>>, %arg5: memref<1x32xf32, #tpu.memory_space<vmem>>, %arg6: memref<1x32xf32, #tpu.memory_space<vmem>>, %arg7: memref<32x128xbf16, #tpu.memory_space<vmem>>, %arg8: memref<1x128xf32, #tpu.memory_space<vmem>>, %arg9: memref<16x128xf32, #tpu.memory_space<vmem>>, %arg10: memref<16x32xbf16, #tpu.memory_space<vmem>>) attributes {dimension_semantics = [#tpu.dimension_semantics<parallel>, #tpu.dimension_semantics<arbitrary>], iteration_bounds = array<i64: 1, 1>, scalar_prefetch = 0 : i64, scratch_operands = 1 : i64, tpu.core_type = #tpu.core_type<tc>, window_params = [{transform_indices = @transform_0, window_bounds = array<i64: 16, 32>}, {pipeline_mode = #tpu.pipeline_mode<synchronous>, transform_indices = @transform_1, window_bounds = array<i64: 32, 32>}, {pipeline_mode = #tpu.pipeline_mode<synchronous>, transform_indices = @transform_2, window_bounds = array<i64: 1, 32>}, {pipeline_mode = #tpu.pipeline_mode<synchronous>, transform_indices = @transform_3, window_bounds = array<i64: 1, 32>}, {pipeline_mode = #tpu.pipeline_mode<synchronous>, transform_indices = @transform_4, window_bounds = array<i64: 1, 32>}, {transform_indices = @transform_5, window_bounds = array<i64: 32, 128>}, {transform_indices = @transform_6, window_bounds = array<i64: 1, 128>}, {transform_indices = @transform_7, window_bounds = array<i64: 16, 128>}]} {
    %c0_i32 = arith.constant 0 : i32
    %0 = arith.cmpi eq, %arg1, %c0_i32 : i32
    %1 = arith.extui %0 : i1 to i32
    %c0_i32_0 = arith.constant 0 : i32
    %2 = arith.cmpi ne, %1, %c0_i32_0 : i32
    scf.if %2 {
      %c0_8 = arith.constant 0 : index
      %c0_9 = arith.constant 0 : index
      %10 = vector.load %arg2[%c0_8, %c0_9] : memref<16x32xbf16, #tpu.memory_space<vmem>>, vector<16x32xbf16>
      %c0_10 = arith.constant 0 : index
      %c0_11 = arith.constant 0 : index
      %11 = vector.load %arg3[%c0_10, %c0_11] : memref<32x32xbf16, #tpu.memory_space<vmem>>, vector<32x32xbf16>
      %cst_12 = arith.constant dense<0.000000e+00> : vector<16x32xf32>
      %12 = tpu.matmul %10, %11, %cst_12 {dimension_numbers = #tpu.dot_dimension_numbers<[1], [0], [0], [1], [0, 0, 1, 1], [], []>} : vector<16x32xbf16>, vector<32x32xbf16>, vector<16x32xf32> -> vector<16x32xf32>
      %c0_13 = arith.constant 0 : index
      %c0_14 = arith.constant 0 : index
      %13 = vector.load %arg4[%c0_13, %c0_14] : memref<1x32xf32, #tpu.memory_space<vmem>>, vector<1x32xf32>
      %14 = vector.broadcast %13 : vector<1x32xf32> to vector<16x32xf32>
      %15 = arith.addf %12, %14 : vector<16x32xf32>
      %cst_15 = arith.constant 5.000000e-01 : f32
      %16 = vector.broadcast %cst_15 : f32 to vector<16x32xf32>
      %17 = arith.mulf %16, %15 : vector<16x32xf32>
      %cst_16 = arith.constant 0.707106769 : f32
      %18 = vector.broadcast %cst_16 : f32 to vector<16x32xf32>
      %19 = arith.mulf %15, %18 : vector<16x32xf32>
      %20 = math.erf %19 : vector<16x32xf32>
      %cst_17 = arith.constant 1.000000e+00 : f32
      %21 = vector.broadcast %cst_17 : f32 to vector<16x32xf32>
      %22 = arith.addf %21, %20 : vector<16x32xf32>
      %23 = arith.mulf %17, %22 : vector<16x32xf32>
      %cst_18 = arith.constant dense<0.000000e+00> : vector<16xf32>
      %24 = vector.multi_reduction <add>, %23, %cst_18 [1] : vector<16x32xf32> to vector<16xf32>
      %25 = vector.shape_cast %24 : vector<16xf32> to vector<16x1xf32>
      %cst_19 = arith.constant 3.200000e+01 : f32
      %26 = vector.broadcast %cst_19 : f32 to vector<16x1xf32>
      %27 = arith.divf %25, %26 : vector<16x1xf32>
      %28 = vector.broadcast %27 : vector<16x1xf32> to vector<16x32xf32>
      %29 = arith.subf %23, %28 : vector<16x32xf32>
      %30 = arith.mulf %29, %29 : vector<16x32xf32>
      %cst_20 = arith.constant dense<0.000000e+00> : vector<16xf32>
      %31 = vector.multi_reduction <add>, %30, %cst_20 [1] : vector<16x32xf32> to vector<16xf32>
      %32 = vector.shape_cast %31 : vector<16xf32> to vector<16x1xf32>
      %cst_21 = arith.constant 3.200000e+01 : f32
      %33 = vector.broadcast %cst_21 : f32 to vector<16x1xf32>
      %34 = arith.divf %32, %33 : vector<16x1xf32>
      %35 = vector.broadcast %27 : vector<16x1xf32> to vector<16x32xf32>
      %36 = arith.subf %23, %35 : vector<16x32xf32>
      %cst_22 = arith.constant 9.99999996E-13 : f32
      %37 = vector.broadcast %cst_22 : f32 to vector<16x1xf32>
      %38 = arith.addf %34, %37 : vector<16x1xf32>
      %39 = math.rsqrt %38 : vector<16x1xf32>
      %40 = vector.broadcast %39 : vector<16x1xf32> to vector<16x32xf32>
      %41 = arith.mulf %36, %40 : vector<16x32xf32>
      %c0_23 = arith.constant 0 : index
      %c0_24 = arith.constant 0 : index
      %42 = vector.load %arg5[%c0_23, %c0_24] : memref<1x32xf32, #tpu.memory_space<vmem>>, vector<1x32xf32>
      %43 = vector.broadcast %42 : vector<1x32xf32> to vector<16x32xf32>
      %44 = arith.mulf %41, %43 : vector<16x32xf32>
      %c0_25 = arith.constant 0 : index
      %c0_26 = arith.constant 0 : index
      %45 = vector.load %arg6[%c0_25, %c0_26] : memref<1x32xf32, #tpu.memory_space<vmem>>, vector<1x32xf32>
      %46 = vector.broadcast %45 : vector<1x32xf32> to vector<16x32xf32>
      %47 = arith.addf %44, %46 : vector<16x32xf32>
      %48 = arith.truncf %47 : vector<16x32xf32> to vector<16x32xbf16>
      %c0_27 = arith.constant 0 : index
      %c0_28 = arith.constant 0 : index
      %49 = vector.load %arg10[%c0_27, %c0_28] : memref<16x32xbf16, #tpu.memory_space<vmem>>, vector<16x32xbf16>
      tpu.vector_store %arg10[%c0_27, %c0_28], %48 {strides = array<i32>} : memref<16x32xbf16, #tpu.memory_space<vmem>>, vector<16x32xbf16>,
    } else {
    }
    %c0 = arith.constant 0 : index
    %c0_1 = arith.constant 0 : index
    %3 = vector.load %arg10[%c0, %c0_1] : memref<16x32xbf16, #tpu.memory_space<vmem>>, vector<16x32xbf16>
    %c0_2 = arith.constant 0 : index
    %c0_3 = arith.constant 0 : index
    %4 = vector.load %arg7[%c0_2, %c0_3] : memref<32x128xbf16, #tpu.memory_space<vmem>>, vector<32x128xbf16>
    %cst = arith.constant dense<0.000000e+00> : vector<16x128xf32>
    %5 = tpu.matmul %3, %4, %cst {dimension_numbers = #tpu.dot_dimension_numbers<[1], [0], [0], [1], [0, 0, 1, 1], [], []>} : vector<16x32xbf16>, vector<32x128xbf16>, vector<16x128xf32> -> vector<16x128xf32>
    %c0_4 = arith.constant 0 : index
    %c0_5 = arith.constant 0 : index
    %6 = vector.load %arg8[%c0_4, %c0_5] : memref<1x128xf32, #tpu.memory_space<vmem>>, vector<1x128xf32>
    %7 = vector.broadcast %6 : vector<1x128xf32> to vector<16x128xf32>
    %8 = arith.addf %5, %7 : vector<16x128xf32>
    %c0_6 = arith.constant 0 : index
    %c0_7 = arith.constant 0 : index
    %9 = vector.load %arg9[%c0_6, %c0_7] : memref<16x128xf32, #tpu.memory_space<vmem>>, vector<16x128xf32>
    tpu.vector_store %arg9[%c0_6, %c0_7], %8 {strides = array<i32>} : memref<16x128xf32, #tpu.memory_space<vmem>>, vector<16x128xf32>,
    return
  }
  func.func @transform_0(%arg0: i32, %arg1: i32) -> (i32, i32) {
    %c0_i32 = arith.constant 0 : i32
    %c0_i32_0 = arith.constant 0 : i32
    return %arg0, %c0_i32 : i32, i32
  }
  func.func @transform_1(%arg0: i32, %arg1: i32) -> (i32, i32) {
    %c0_i32 = arith.constant 0 : i32
    %c0_i32_0 = arith.constant 0 : i32
    %c0_i32_1 = arith.constant 0 : i32
    return %c0_i32, %c0_i32_0 : i32, i32
  }
  func.func @transform_2(%arg0: i32, %arg1: i32) -> (i32, i32) {
    %c0_i32 = arith.constant 0 : i32
    %c0_i32_0 = arith.constant 0 : i32
    %c0_i32_1 = arith.constant 0 : i32
    return %c0_i32, %c0_i32_0 : i32, i32
  }
  func.func @transform_3(%arg0: i32, %arg1: i32) -> (i32, i32) {
    %c0_i32 = arith.constant 0 : i32
    %c0_i32_0 = arith.constant 0 : i32
    %c0_i32_1 = arith.constant 0 : i32
    return %c0_i32, %c0_i32_0 : i32, i32
  }
  func.func @transform_4(%arg0: i32, %arg1: i32) -> (i32, i32) {
    %c0_i32 = arith.constant 0 : i32
    %c0_i32_0 = arith.constant 0 : i32
    %c0_i32_1 = arith.constant 0 : i32
    return %c0_i32, %c0_i32_0 : i32, i32
  }
  func.func @transform_5(%arg0: i32, %arg1: i32) -> (i32, i32) {
    %c0_i32 = arith.constant 0 : i32
    %c0_i32_0 = arith.constant 0 : i32
    return %c0_i32, %arg1 : i32, i32
  }
  func.func @transform_6(%arg0: i32, %arg1: i32) -> (i32, i32) {
    %c0_i32 = arith.constant 0 : i32
    %c0_i32_0 = arith.constant 0 : i32
    return %c0_i32, %arg1 : i32, i32
  }
  func.func @transform_7(%arg0: i32, %arg1: i32) -> (i32, i32) {
    %c0_i32 = arith.constant 0 : i32
    return %arg0, %arg1 : i32, i32
  }
}

</mosaic_0001>

<llo_original>
// kernel: tpu_custom_call.1
$region0: #{tpu_custom_call.1}
  #allocation0 [shape = 'u32[]', space=smem, size = 0x4, offset = 0x4, fixed_abs, tag = 'smem constant byte address 0x4 - core index']
  #allocation1 [shape = 'u32[144,128]{1,0:T(1,128)}', space=vmem, size = 0x12000, scoped, tag = 'internal scratch']
  #allocation2 [shape = 'bf16[16,32]{1,0:T(8,128)(2,1)}', space=vmem, size = 0x1000, scoped, tag = 'scratch operand']
  %s0 = inlined_call_operand.hbm [shape: bf16[16,32], index: 0, kind: input, shape index: {}]
  %s1 = inlined_call_operand.hbm [shape: bf16[32,32], index: 1, kind: input, shape index: {}]
  %s2 = inlined_call_operand.vmem [shape: f32[1,32], index: 2, kind: input, shape index: {}]
  %s3 = inlined_call_operand.vmem [shape: f32[1,32], index: 3, kind: input, shape index: {}]
  %s4 = inlined_call_operand.vmem [shape: f32[1,32], index: 4, kind: input, shape index: {}]
  %s5 = inlined_call_operand.hbm [shape: bf16[32,128], index: 5, kind: input, shape index: {}]
  %s6 = inlined_call_operand.vmem [shape: f32[1,128], index: 6, kind: input, shape index: {}]
  %s7 = inlined_call_operand.hbm [shape: f32[16,128], index: 7, kind: output, shape index: {}]
  %s8 = sld [smem:[#allocation0]]
  $region54: #{tpu_custom_call.1} parent=0
    _
  %s10 = ssub.s32 1, %s8
  %s11 = scalar_select 0, %s10, %s8
  $region1: #{tpu_custom_call.1} parent=0
    #allocation3 [shape = 'u8[4096]{0}', space=vmem, size = 0x1000, scoped, tag = 'input window, operand 0, single buffered']
    #allocation4 [shape = 's32[1]{0}', space=sflag, size = 0x4, scoped, tag = 'scoped memory for tpu_custom_call.1']
    #allocation5 [shape = 's32[1]{0}', space=sflag, size = 0x4, scoped, tag = 'scoped memory for tpu_custom_call.1']
    #allocation6 [shape = 'u8[8192]{0}', space=vmem, size = 0x2000, scoped, tag = 'input window, operand 1, single buffered']
    #allocation7 [shape = 's32[1]{0}', space=sflag, size = 0x4, scoped, tag = 'scoped memory for tpu_custom_call.1']
    #allocation8 [shape = 'u8[8192]{0}', space=vmem, size = 0x2000, scoped, tag = 'input window, operand 5, single buffered']
    #allocation9 [shape = 'u8[8192]{0}', space=vmem, size = 0x2000, scoped, tag = 'output window, operand 0, single buffered']
    %12 = vsyncpa [#allocation4], 0
    %13 = vsyncpa [#allocation7], 0
    %14 = vsyncpa [#allocation5], 0
    // Predicated region
    $region2: #{tpu_custom_call.1} parent=1 // pred_check
      _
    $region3: #{tpu_custom_call.1} parent=1 // pred_check_branch
      %16 = sbr.rel (0) target = $region5
    $region4: #{tpu_custom_call.1} parent=1 // pred_region
      %s18 = ssub.s32 128, 128
      %19 = vsyncadd [#allocation4], %s18
      %s20 = sshll.u32 [#allocation3], 4
      %s21 = int_to_ptr.vmem [resolvable:$true] %s20
      %26 = dma.hbm_to_vmem [thread:$0]  %s0, 128, %s21, [#allocation4], 64, 64, 4
    $region5: #{tpu_custom_call.1} parent=1 // pred_fallthru
      _
    // Predicated region
    $region6: #{tpu_custom_call.1} parent=1 // pred_check
      _
    $region7: #{tpu_custom_call.1} parent=1 // pred_check_branch
      %28 = sbr.rel (0) target = $region9
    $region8: #{tpu_custom_call.1} parent=1 // pred_region
      %s30 = ssub.s32 256, 256
      %31 = vsyncadd [#allocation7], %s30
      %s32 = sshll.u32 [#allocation6], 4
      %s33 = int_to_ptr.vmem [resolvable:$true] %s32
      %38 = dma.hbm_to_vmem [thread:$0]  %s1, 256, %s33, [#allocation7], 64, 64, 4
    $region9: #{tpu_custom_call.1} parent=1 // pred_fallthru
      _
    // Predicated region
    $region10: #{tpu_custom_call.1} parent=1 // pred_check
      _
    $region11: #{tpu_custom_call.1} parent=1 // pred_check_branch
      %40 = sbr.rel (0) target = $region13
    $region12: #{tpu_custom_call.1} parent=1 // pred_region
      _
    $region13: #{tpu_custom_call.1} parent=1 // pred_fallthru
      _
    // Predicated region
    $region14: #{tpu_custom_call.1} parent=1 // pred_check
      _
    $region15: #{tpu_custom_call.1} parent=1 // pred_check_branch
      %42 = sbr.rel (0) target = $region17
    $region16: #{tpu_custom_call.1} parent=1 // pred_region
      _
    $region17: #{tpu_custom_call.1} parent=1 // pred_fallthru
      _
    // Predicated region
    $region18: #{tpu_custom_call.1} parent=1 // pred_check
      _
    $region19: #{tpu_custom_call.1} parent=1 // pred_check_branch
      %44 = sbr.rel (0) target = $region21
    $region20: #{tpu_custom_call.1} parent=1 // pred_region
      _
    $region21: #{tpu_custom_call.1} parent=1 // pred_fallthru
      _
    // Predicated region
    $region22: #{tpu_custom_call.1} parent=1 // pred_check
      _
    $region23: #{tpu_custom_call.1} parent=1 // pred_check_branch
      %46 = sbr.rel (0) target = $region25
    $region24: #{tpu_custom_call.1} parent=1 // pred_region
      %s48 = ssub.s32 256, 256
      %49 = vsyncadd [#allocation7], %s48
      %s50 = sshll.u32 [#allocation8], 4
      %s51 = int_to_ptr.vmem [resolvable:$true] %s50
      %56 = dma.hbm_to_vmem [thread:$0]  %s5, 256, %s51, [#allocation7], 64, 64, 4
    $region25: #{tpu_custom_call.1} parent=1 // pred_fallthru
      _
    // Predicated region
    $region26: #{tpu_custom_call.1} parent=1 // pred_check
      _
    $region27: #{tpu_custom_call.1} parent=1 // pred_check_branch
      %58 = sbr.rel (0) target = $region29
    $region28: #{tpu_custom_call.1} parent=1 // pred_region
      _
    $region29: #{tpu_custom_call.1} parent=1 // pred_fallthru
      _
    // Predicated region
    $region30: #{tpu_custom_call.1} parent=1 // pred_check
      _
    $region31: #{tpu_custom_call.1} parent=1 // pred_check_branch
      %60 = sbr.rel (0) target = $region33
    $region32: #{tpu_custom_call.1} parent=1 // pred_region
      %61 = dma.done [#allocation4], 128
    $region33: #{tpu_custom_call.1} parent=1 // pred_fallthru
      _
    // Predicated region
    $region34: #{tpu_custom_call.1} parent=1 // pred_check
      _
    $region35: #{tpu_custom_call.1} parent=1 // pred_check_branch
      %63 = sbr.rel (0) target = $region37
    $region36: #{tpu_custom_call.1} parent=1 // pred_region
      %64 = dma.done [#allocation7], 256
    $region37: #{tpu_custom_call.1} parent=1 // pred_fallthru
      _
    // Predicated region
    $region38: #{tpu_custom_call.1} parent=1 // pred_check
      _
    $region39: #{tpu_custom_call.1} parent=1 // pred_check_branch
      %66 = sbr.rel (0) target = $region41
    $region40: #{tpu_custom_call.1} parent=1 // pred_region
      %67 = dma.done [#allocation7], 256
    $region41: #{tpu_custom_call.1} parent=1 // pred_fallthru
      _
    %p69 = scmp.eq.s32.totalorder 0, 0
    // Predicated region
    $region42: #{tpu_custom_call.1} parent=1 // pred_check
      %p70 = pneg %p69
    $region43: #{tpu_custom_call.1} parent=1 // pred_check_branch
      %72 = sbr.rel (%p70) target = $region45
    $region44: #{tpu_custom_call.1} parent=1 // pred_region
      %v73 = vld [vmem:[#allocation3] sm:$0xf]
      %v74 = vld [vmem:[#allocation3 + $0x4] sm:$0xf]
      %v75 = vld [vmem:[#allocation6] sm:$0xf]
      %v76 = vld [vmem:[#allocation6 + $0x4] sm:$0xf]
      %v77 = vld [vmem:[#allocation6 + $0x8] sm:$0xf]
      %v78 = vld [vmem:[#allocation6 + $0xc] sm:$0xf]
      %v79 = vld [vmem:[%s2] sm:$0x1]
      %v81 = vlaneseq
      %v82 = vshrl.u32 %v81, 7
      %v83 = vsub.s32 0, %v82
      %v84 = vrot.slane %v79, %v83
      %v88 = vunpack.c.l.b16 %v73
      %v89 = vunpack.c.l.b16 %v74
      %v90 = vpack.c.b16 %v89, %v88
      %v95 = vunpack.c.l.b16 %v75
      %v96 = vunpack.c.l.b16 %v76
      %v97 = vunpack.c.l.b16 %v77
      %v98 = vunpack.c.l.b16 %v78
      %v99 = vpack.c.b16 %v96, %v95
      %v100 = vpack.c.b16 %v98, %v97
      %vm103 = vcmask 261120
      %v105 = vsel %vm103, %v90, 0
      %107 = vmatprep.subr.bf16.mxu0 0
      %108 = vmatpush1.bf16.msra.mxu0 0
      %109 = vmatprep.subr.bf16.mxu0 0
      %110 = vmatpush1.bf16.msra.mxu0 0
      %111 = vmatprep.subr.bf16.mxu0 0
      %112 = vmatpush1.bf16.msra.mxu0 0
      %113 = vmatprep.subr.bf16.mxu0 0
      %114 = vmatpush1.bf16.msra.mxu0 0
      %115 = vmatprep.subr.bf16.mxu0 0
      %116 = vmatpush1.bf16.msra.mxu0 0
      %117 = vmatprep.subr.bf16.mxu0 0
      %118 = vmatpush1.bf16.msra.mxu0 0
      %119 = vmatprep.subr.bf16.mxu0 0
      %120 = vmatpush1.bf16.msra.mxu0 %v100
      %121 = vmatprep.subr.bf16.mxu0 0
      %122 = vmatpush1.bf16.msra.mxu0 %v99
      %123 = vmatprep.subr.bf16.mxu0 0
      %124 = vmatpush2.bf16.msra.mxu0 0
      %125 = vmatprep.subr.bf16.mxu0 0
      %126 = vmatpush2.bf16.msra.mxu0 0
      %127 = vmatprep.subr.bf16.mxu0 0
      %128 = vmatpush2.bf16.msra.mxu0 0
      %129 = vmatprep.subr.bf16.mxu0 0
      %130 = vmatpush2.bf16.msra.mxu0 0
      %131 = vmatprep.subr.bf16.mxu0 0
      %132 = vmatpush2.bf16.msra.mxu0 0
      %133 = vmatprep.subr.bf16.mxu0 0
      %134 = vmatpush2.bf16.msra.mxu0 0
      %135 = vmatprep.subr.bf16.mxu0 0
      %136 = vmatpush2.bf16.msra.mxu0 0
      %137 = vmatprep.subr.bf16.mxu0 0
      %138 = vmatpush2.bf16.msra.mxu0 0
      %139 = vmatprep.mubr.bf16.mxu0 0
      %140 = vmatmul.mubr.bf16.gmra.mxu0 %v105
      %v141 = vpop.f32.mrf.mxu0
      %v142 = vadd.f32 %v84, %v141
      %v143 = vpop.f32.mrf.mxu0
      %v144 = vpop.f32.mrf.mxu0
      %v145 = vadd.f32 %v84, %v144
      %v146 = vpop.f32.mrf.mxu0
      %147 = vdwg.mxu0
      %v148 = vmul.f32 %v142, 0.5
      %v149 = vmul.f32 %v145, 0.5
      %v150 = vmul.f32 %v142, 0.70710677
      %v151 = vmul.f32 %v145, 0.70710677
      %v152 = verf.f32.pop %v150
      %v153 = verf.f32.pop %v151
      %v154 = vadd.f32 %v152, 1.0
      %v155 = vadd.f32 %v153, 1.0
      %v156 = vmul.f32 %v148, %v154
      %v157 = vmul.f32 %v149, %v155
      %v158 = vsel %vm103, %v156, 0.0
      %159 = vadd.xlane.f32.xlu0 %v158
      %v160 = vpop.xlane.xlu0 %159
      %v161 = vsel %vm103, %v157, 0.0
      %162 = vadd.xlane.f32.xlu0 %v161
      %v163 = vpop.xlane.xlu0 %162
      %v164 = vrcp.pop 32.0
      %v165 = vmul.f32 %v160, %v164
      %v166 = vmul.f32 %v163, %v164
      %v167 = vsub.f32 %v156, %v165
      %v168 = vsub.f32 %v157, %v166
      %v169 = vmul.f32 %v167, %v167
      %v170 = vmul.f32 %v168, %v168
      %v171 = vsel %vm103, %v169, 0.0
      %172 = vadd.xlane.f32.xlu0 %v171
      %v173 = vpop.xlane.xlu0 %172
      %v174 = vsel %vm103, %v170, 0.0
      %175 = vadd.xlane.f32.xlu0 %v174
      %v176 = vpop.xlane.xlu0 %175
      %v177 = vmul.f32 %v173, %v164
      %v178 = vmul.f32 %v176, %v164
      %v179 = vadd.f32 %v177, 1e-12
      %v180 = vadd.f32 %v178, 1e-12
      %v181 = vrsqrt.pop %v179
      %v182 = vrsqrt.pop %v180
      %v183 = vmul.f32 %v167, %v181
      %v184 = vmul.f32 %v168, %v182
      %v185 = vld [vmem:[%s3] sm:$0x1]
      %v187 = vlaneseq
      %v188 = vshrl.u32 %v187, 7
      %v189 = vsub.s32 0, %v188
      %v190 = vrot.slane %v185, %v189
      %v192 = vmul.f32 %v183, %v190
      %v193 = vmul.f32 %v184, %v190
      %v194 = vld [vmem:[%s4] sm:$0x1]
      %v196 = vlaneseq
      %v197 = vshrl.u32 %v196, 7
      %v198 = vsub.s32 0, %v197
      %v199 = vrot.slane %v194, %v198
      %v201 = vadd.f32 %v192, %v199
      %v202 = vadd.f32 %v193, %v199
      %v203 = vpack.c.bf16 %v202, %v201
      %v205 = vunpack.c.l.b16 %v203
      %v206 = vunpack.c.h.b16 %v203
      %v207 = vpack.c.b16 %v205, %v205
      %v208 = vpack.c.b16 %v206, %v206
      %vm211 = vcmask 257024
      %212 = vst.msk [vmem:[#allocation2] sm:$0xf] %vm211, %v207
      %213 = vst.msk [vmem:[#allocation2 + $0x4] sm:$0xf] %vm211, %v208
    $region45: #{tpu_custom_call.1} parent=1 // pred_fallthru
      _
    %v214 = vld [vmem:[#allocation2] sm:$0xf]
    %v215 = vld [vmem:[#allocation2 + $0x4] sm:$0xf]
    %v216 = vld [vmem:[#allocation8] sm:$0xf]
    %v217 = vld [vmem:[#allocation8 + $0x4] sm:$0xf]
    %v218 = vld [vmem:[#allocation8 + $0x8] sm:$0xf]
    %v219 = vld [vmem:[#allocation8 + $0xc] sm:$0xf]
    %v220 = vld [vmem:[%s6] sm:$0x1]
    %v222 = vlaneseq
    %v223 = vshrl.u32 %v222, 7
    %v224 = vsub.s32 0, %v223
    %v225 = vrot.slane %v220, %v224
    %v229 = vunpack.c.l.b16 %v214
    %v230 = vunpack.c.l.b16 %v215
    %v231 = vpack.c.b16 %v230, %v229
    %v236 = vunpack.c.l.b16 %v216
    %v237 = vunpack.c.l.b16 %v217
    %v238 = vunpack.c.l.b16 %v218
    %v239 = vunpack.c.l.b16 %v219
    %v240 = vpack.c.b16 %v237, %v236
    %v241 = vpack.c.b16 %v239, %v238
    %vm244 = vcmask 261120
    %v246 = vsel %vm244, %v231, 0
    %248 = vmatprep.subr.bf16.mxu0 0
    %249 = vmatpush1.bf16.msra.mxu0 0
    %250 = vmatprep.subr.bf16.mxu0 0
    %251 = vmatpush1.bf16.msra.mxu0 0
    %252 = vmatprep.subr.bf16.mxu0 0
    %253 = vmatpush1.bf16.msra.mxu0 0
    %254 = vmatprep.subr.bf16.mxu0 0
    %255 = vmatpush1.bf16.msra.mxu0 0
    %256 = vmatprep.subr.bf16.mxu0 0
    %257 = vmatpush1.bf16.msra.mxu0 0
    %258 = vmatprep.subr.bf16.mxu0 0
    %259 = vmatpush1.bf16.msra.mxu0 0
    %260 = vmatprep.subr.bf16.mxu0 0
    %261 = vmatpush1.bf16.msra.mxu0 %v241
    %262 = vmatprep.subr.bf16.mxu0 0
    %263 = vmatpush1.bf16.msra.mxu0 %v240
    %264 = vmatprep.subr.bf16.mxu0 0
    %265 = vmatpush2.bf16.msra.mxu0 0
    %266 = vmatprep.subr.bf16.mxu0 0
    %267 = vmatpush2.bf16.msra.mxu0 0
    %268 = vmatprep.subr.bf16.mxu0 0
    %269 = vmatpush2.bf16.msra.mxu0 0
    %270 = vmatprep.subr.bf16.mxu0 0
    %271 = vmatpush2.bf16.msra.mxu0 0
    %272 = vmatprep.subr.bf16.mxu0 0
    %273 = vmatpush2.bf16.msra.mxu0 0
    %274 = vmatprep.subr.bf16.mxu0 0
    %275 = vmatpush2.bf16.msra.mxu0 0
    %276 = vmatprep.subr.bf16.mxu0 0
    %277 = vmatpush2.bf16.msra.mxu0 0
    %278 = vmatprep.subr.bf16.mxu0 0
    %279 = vmatpush2.bf16.msra.mxu0 0
    %280 = vmatprep.mubr.bf16.mxu0 0
    %281 = vmatmul.mubr.bf16.gmra.mxu0 %v246
    %v282 = vpop.f32.mrf.mxu0
    %v283 = vadd.f32 %v225, %v282
    %v284 = vpop.f32.mrf.mxu0
    %v285 = vpop.f32.mrf.mxu0
    %v286 = vadd.f32 %v225, %v285
    %v287 = vpop.f32.mrf.mxu0
    %288 = vdwg.mxu0
    %289 = vst [vmem:[#allocation9] sm:$0xff] %v283
    %290 = vst [vmem:[#allocation9 + $0x8] sm:$0xff] %v286
    // Predicated region
    $region46: #{tpu_custom_call.1} parent=1 // pred_check
      _
    $region47: #{tpu_custom_call.1} parent=1 // pred_check_branch
      %292 = sbr.rel (0) target = $region49
    $region48: #{tpu_custom_call.1} parent=1 // pred_region
      %s294 = ssub.s32 256, 256
      %295 = vsyncadd [#allocation5], %s294
      %s296 = sshll.u32 [#allocation9], 4
      %s297 = int_to_ptr.vmem [resolvable:$true] %s296
      %302 = dma.vmem_to_hbm [thread:$0]  %s297, 256, %s7, [#allocation5], 128, 128, 8
    $region49: #{tpu_custom_call.1} parent=1 // pred_fallthru
      _
    // Predicated region
    $region50: #{tpu_custom_call.1} parent=1 // pred_check
      _
    $region51: #{tpu_custom_call.1} parent=1 // pred_check_branch
      %304 = sbr.rel (0) target = $region53
    $region52: #{tpu_custom_call.1} parent=1 // pred_region
      %305 = dma.done [#allocation5], 256
    $region53: #{tpu_custom_call.1} parent=1 // pred_fallthru
      _
    %306 = vsyncpa [#allocation4], 1
    %307 = vsyncpa [#allocation7], 1
    %308 = vsyncpa [#allocation5], 1

</llo_original>
